<compile_context>
chip_gen: v7x
topology: tpu7x:2x2x1
jax: 0.10.0
libtpu: 0.0.40
codegen_flags: <defaults>
</compile_context>

<pallas_src>
import jax
import jax.numpy as jnp
from jax.experimental import pallas as pl
from jax.experimental.pallas import tpu as pltpu


def _round_up(x, m):
    return ((x + m - 1) // m) * m


def discriminator_kernel(z_ref, w1_ref, w2_ref, o_ref):
    # fc1 (+ folded b1): bf16 operands on the MXU, f32 accumulation.
    h = jnp.dot(z_ref[...], w1_ref[...], preferred_element_type=jnp.float32)
    h = jnp.maximum(h, 0.0)                       # ReLU on the VPU (ones column stays 1)
    # fc2 (+ folded b2): VPU multiply + XLU lane reduction -> single real column.
    logit = jnp.sum(h * w2_ref[...], axis=-1, keepdims=True)      # (tb, 1), f32
    # sigmoid in f32; exp lands on the EUP.  Only tb elements per tile now.
    o_ref[...] = (1.0 / (1.0 + jnp.exp(-logit))).astype(o_ref.dtype)


def discriminator_forward(z, w1, b1, w2, b2, *, tb=512, mxu_dtype=jnp.bfloat16):
    """z: [B, Z]; w1: [Z, H]; b1: [H]; w2: [H, 1]; b2: [1]  ->  [B, 1] (f32)."""
    B, Z = z.shape
    H = w1.shape[1]
    assert w1.shape == (Z, H) and b1.shape == (H,)
    assert w2.shape == (H, 1) and b2.shape == (1,)

    K = Z + 1                       # augmented input dim (fc1 bias fold); not padded
    Hp = _round_up(H + 1, 128)      # hidden padded to lane width (+1 ones column)

    # ---- one-time parameter packing (wrapper side, outside the kernel) ----
    w1p = jnp.zeros((K, Hp), jnp.float32)
    w1p = w1p.at[:Z, :H].set(w1.astype(jnp.float32))
    w1p = w1p.at[Z, :H].set(b1.astype(jnp.float32))   # fc1 bias row (times ones column)
    w1p = w1p.at[Z, H].set(1.0)                        # hidden col H == relu(1) == 1
    w1p = w1p.astype(mxu_dtype)                        # MXU operand dtype

    w2p = jnp.zeros((1, Hp), jnp.float32)              # fc2 row; stays f32 (VPU operand)
    w2p = w2p.at[0, :H].set(w2[:, 0].astype(jnp.float32))
    w2p = w2p.at[0, H].set(b2[0].astype(jnp.float32))  # fc2 bias via the ones hidden col

    # ---- batch tiling: big tiles (grid-step overhead), bf16-friendly multiples of 16,
    #      and >=2 grid steps on large batches so "parallel" uses both v7x TCs ----
    Bp16 = _round_up(max(B, 1), 16)
    tb = _round_up(max(16, min(tb, Bp16)), 16)
    if Bp16 <= tb and Bp16 >= 512:
        tb = _round_up(pl.cdiv(Bp16, 2), 16)           # split into 2 tiles for 2 TCs
    Bp = _round_up(B, tb)

    # ---- activation prep: ones column, pad batch, cast MXU operand to bf16 ----
    z_aug = jnp.concatenate([z.astype(jnp.float32), jnp.ones((B, 1), jnp.float32)], axis=1)
    if Bp != B:
        z_aug = jnp.pad(z_aug, ((0, Bp - B), (0, 0)))  # pad rows -> sigmoid(0)=0.5, sliced off
    z_aug = z_aug.astype(mxu_dtype)

    # VMEM: resident weights ~K*Hp*2 + Hp*4 bytes, plus double-buffered (tb,K) bf16 in
    # and (tb,1) f32 out tiles (lane-padded in VMEM) -- a few MiB even at tb=2048,
    # well under the scoped default on v5e/v6e/v7x, so no vmem_limit_bytes needed.
    in_item = jnp.dtype(mxu_dtype).itemsize
    cost = pl.CostEstimate(
        flops=2 * Bp * K * Hp + 2 * Bp * Hp,          # fc1 MXU + fc2 VPU mult/add
        transcendentals=Bp,                            # one exp per (padded) row
        bytes_accessed=in_item * (Bp * K + K * Hp) + 4 * (Hp + Bp),
    )

    out = pl.pallas_call(
        discriminator_kernel,
        out_shape=jax.ShapeDtypeStruct((Bp, 1), jnp.float32),
        grid_spec=pltpu.PrefetchScalarGridSpec(
            num_scalar_prefetch=0,
            grid=(Bp // tb,),
            in_specs=[
                pl.BlockSpec((tb, K), lambda i: (i, 0)),    # streamed, double-buffered
                pl.BlockSpec((K, Hp), lambda i: (0, 0)),    # VMEM-resident fc1 weights
                pl.BlockSpec((1, Hp), lambda i: (0, 0)),    # VMEM-resident fc2 row (f32)
            ],
            out_specs=pl.BlockSpec((tb, 1), lambda i: (i, 0)),  # narrow writeback
        ),
        compiler_params=pltpu.CompilerParams(
            dimension_semantics=("parallel",),   # batch tiles independent -> 2-TC on v7x
        ),
        cost_estimate=cost,
    )(z_aug, w1p, w2p)

    return out[:B, :]    # contiguous slice of a (Bp, 1) array; cheap


def reference(z, w1, b1, w2, b2):
    h = jnp.maximum(z @ w1 + b1, 0.0)
    return 1.0 / (1.0 + jnp.exp(-(h @ w2 + b2)))


def reference_bf16_inputs(z, w1, b1, w2, b2):
    # Matches the kernel's numerics: bf16-rounded MXU operands, f32 everything else.
    f = lambda a: a.astype(jnp.bfloat16).astype(jnp.float32)
    h = jnp.maximum(f(z) @ f(w1) + f(b1), 0.0)
    return 1.0 / (1.0 + jnp.exp(-(h @ w2 + b2)))


if __name__ == "__main__":
    # Small shapes consistent with the module; B chosen so the tb=96 run exercises
    # multiple grid steps plus the batch-padding path.
    B, Z, Hd = 200, 16, 32
    key = jax.random.PRNGKey(0)
    k_z, k_w1, k_b1, k_w2, k_b2 = jax.random.split(key, 5)

    z = jax.random.normal(k_z, (B, Z), dtype=jnp.float32)
    # Deterministic synthetic params (uniform, roughly PyTorch nn.Linear scale),
    # stored [in, out] (transpose of torch's [out, in]).
    w1 = jax.random.uniform(k_w1, (Z, Hd), minval=-1.0 / Z**0.5,
                            maxval=1.0 / Z**0.5, dtype=jnp.float32)
    b1 = jax.random.uniform(k_b1, (Hd,), minval=-1.0 / Z**0.5,
                            maxval=1.0 / Z**0.5, dtype=jnp.float32)
    w2 = jax.random.uniform(k_w2, (Hd, 1), minval=-1.0 / Hd**0.5,
                            maxval=1.0 / Hd**0.5, dtype=jnp.float32)
    b2 = jax.random.uniform(k_b2, (1,), minval=-1.0 / Hd**0.5,
                            maxval=1.0 / Hd**0.5, dtype=jnp.float32)

    ref_f32 = reference(z, w1, b1, w2, b2)
    ref_bf16 = reference_bf16_inputs(z, w1, b1, w2, b2)

    # Default path (single batch tile at this small B).
    out = jax.block_until_ready(discriminator_forward(z, w1, b1, w2, b2))
    assert out.shape == (B, 1), out.shape
    assert jnp.allclose(out, ref_bf16, atol=1e-4, rtol=1e-4), "mismatch vs bf16-matched ref"
    assert jnp.allclose(out, ref_f32, atol=5e-2, rtol=5e-2), "mismatch vs f32 ref"

    # Multi-tile + padding path: tb=96 -> 3 grid steps over Bp=288 (88 padded rows).
    out2 = jax.block_until_ready(discriminator_forward(z, w1, b1, w2, b2, tb=96))
    assert out2.shape == (B, 1), out2.shape
    assert jnp.allclose(out2, ref_bf16, atol=1e-4, rtol=1e-4), "tiled mismatch vs bf16 ref"

    print("KERNEL_OK")
</pallas_src>

<mosaic_0001>
module attributes {stable_mosaic.version = 11 : i64} {
  func.func @discriminator_kernel(%arg0: i32, %arg1: memref<208x17xbf16, #tpu.memory_space<vmem>>, %arg2: memref<17x128xbf16, #tpu.memory_space<vmem>>, %arg3: memref<1x128xf32, #tpu.memory_space<vmem>>, %arg4: memref<208x1xf32, #tpu.memory_space<vmem>>) attributes {dimension_semantics = [#tpu.dimension_semantics<parallel>], iteration_bounds = array<i64: 1>, scalar_prefetch = 0 : i64, scratch_operands = 0 : i64, tpu.core_type = #tpu.core_type<tc>, window_params = [{transform_indices = @transform_0, window_bounds = array<i64: 208, 17>}, {pipeline_mode = #tpu.pipeline_mode<synchronous>, transform_indices = @transform_1, window_bounds = array<i64: 17, 128>}, {pipeline_mode = #tpu.pipeline_mode<synchronous>, transform_indices = @transform_2, window_bounds = array<i64: 1, 128>}, {transform_indices = @transform_3, window_bounds = array<i64: 208, 1>}]} {
    %c0 = arith.constant 0 : index
    %c0_0 = arith.constant 0 : index
    %0 = vector.load %arg1[%c0, %c0_0] : memref<208x17xbf16, #tpu.memory_space<vmem>>, vector<208x17xbf16>
    %c0_1 = arith.constant 0 : index
    %c0_2 = arith.constant 0 : index
    %1 = vector.load %arg2[%c0_1, %c0_2] : memref<17x128xbf16, #tpu.memory_space<vmem>>, vector<17x128xbf16>
    %cst = arith.constant dense<0.000000e+00> : vector<208x128xf32>
    %2 = tpu.matmul %0, %1, %cst {dimension_numbers = #tpu.dot_dimension_numbers<[1], [0], [0], [1], [0, 0, 1, 1], [], []>} : vector<208x17xbf16>, vector<17x128xbf16>, vector<208x128xf32> -> vector<208x128xf32>
    %cst_3 = arith.constant 0.000000e+00 : f32
    %3 = vector.broadcast %cst_3 : f32 to vector<208x128xf32>
    %4 = arith.maximumf %2, %3 : vector<208x128xf32>
    %c0_4 = arith.constant 0 : index
    %c0_5 = arith.constant 0 : index
    %5 = vector.load %arg3[%c0_4, %c0_5] : memref<1x128xf32, #tpu.memory_space<vmem>>, vector<1x128xf32>
    %6 = vector.broadcast %5 : vector<1x128xf32> to vector<208x128xf32>
    %7 = arith.mulf %4, %6 : vector<208x128xf32>
    %cst_6 = arith.constant dense<0.000000e+00> : vector<208xf32>
    %8 = vector.multi_reduction <add>, %7, %cst_6 [1] : vector<208x128xf32> to vector<208xf32>
    %9 = vector.shape_cast %8 : vector<208xf32> to vector<208x1xf32>
    %cst_7 = arith.constant 0.000000e+00 : f32
    %10 = vector.broadcast %cst_7 : f32 to vector<208x1xf32>
    %11 = arith.subf %10, %9 : vector<208x1xf32>
    %12 = math.exp %11 : vector<208x1xf32>
    %cst_8 = arith.constant 1.000000e+00 : f32
    %13 = vector.broadcast %cst_8 : f32 to vector<208x1xf32>
    %14 = arith.addf %13, %12 : vector<208x1xf32>
    %cst_9 = arith.constant 1.000000e+00 : f32
    %15 = vector.broadcast %cst_9 : f32 to vector<208x1xf32>
    %16 = arith.divf %15, %14 : vector<208x1xf32>
    %c0_10 = arith.constant 0 : index
    %c0_11 = arith.constant 0 : index
    %17 = vector.load %arg4[%c0_10, %c0_11] : memref<208x1xf32, #tpu.memory_space<vmem>>, vector<208x1xf32>
    tpu.vector_store %arg4[%c0_10, %c0_11], %16 {strides = array<i32>} : memref<208x1xf32, #tpu.memory_space<vmem>>, vector<208x1xf32>,
    return
  }
  func.func @transform_0(%arg0: i32) -> (i32, i32) {
    %c0_i32 = arith.constant 0 : i32
    %c0_i32_0 = arith.constant 0 : i32
    return %arg0, %c0_i32 : i32, i32
  }
  func.func @transform_1(%arg0: i32) -> (i32, i32) {
    %c0_i32 = arith.constant 0 : i32
    %c0_i32_0 = arith.constant 0 : i32
    %c0_i32_1 = arith.constant 0 : i32
    return %c0_i32, %c0_i32_0 : i32, i32
  }
  func.func @transform_2(%arg0: i32) -> (i32, i32) {
    %c0_i32 = arith.constant 0 : i32
    %c0_i32_0 = arith.constant 0 : i32
    %c0_i32_1 = arith.constant 0 : i32
    return %c0_i32, %c0_i32_0 : i32, i32
  }
  func.func @transform_3(%arg0: i32) -> (i32, i32) {
    %c0_i32 = arith.constant 0 : i32
    %c0_i32_0 = arith.constant 0 : i32
    return %arg0, %c0_i32 : i32, i32
  }
}

</mosaic_0001>

<llo_original>
// kernel: tpu_custom_call.1
$region0: #{tpu_custom_call.1}
  #allocation0 [shape = 'u32[]', space=smem, size = 0x4, offset = 0x4, fixed_abs, tag = 'smem constant byte address 0x4 - core index']
  #allocation1 [shape = 'u32[144,128]{1,0:T(1,128)}', space=vmem, size = 0x12000, scoped, tag = 'internal scratch']
  %s0 = inlined_call_operand.vmem [shape: bf16[208,17], index: 0, kind: input, shape index: {}]
  %s1 = inlined_call_operand.vmem [shape: bf16[17,128], index: 1, kind: input, shape index: {}]
  %s2 = inlined_call_operand.vmem [shape: f32[1,128], index: 2, kind: input, shape index: {}]
  %s3 = inlined_call_operand.vmem [shape: f32[208,1], index: 3, kind: output, shape index: {}]
  %s4 = sld [smem:[#allocation0]]
  $region22: #{tpu_custom_call.1} parent=0
    _
  %s6 = ssub.s32 1, %s4
  %s7 = scalar_select 0, %s6, %s4
  // Predicated region
  $region2: #{tpu_custom_call.1} parent=0 // pred_check
    _
  $region3: #{tpu_custom_call.1} parent=0 // pred_check_branch
    %9 = sbr.rel (0) target = $region5
  $region4: #{tpu_custom_call.1} parent=0 // pred_region
    _
  $region5: #{tpu_custom_call.1} parent=0 // pred_fallthru
    _
  // Predicated region
  $region6: #{tpu_custom_call.1} parent=0 // pred_check
    _
  $region7: #{tpu_custom_call.1} parent=0 // pred_check_branch
    %11 = sbr.rel (0) target = $region9
  $region8: #{tpu_custom_call.1} parent=0 // pred_region
    _
  $region9: #{tpu_custom_call.1} parent=0 // pred_fallthru
    _
  // Predicated region
  $region10: #{tpu_custom_call.1} parent=0 // pred_check
    _
  $region11: #{tpu_custom_call.1} parent=0 // pred_check_branch
    %13 = sbr.rel (0) target = $region13
  $region12: #{tpu_custom_call.1} parent=0 // pred_region
    _
  $region13: #{tpu_custom_call.1} parent=0 // pred_fallthru
    _
  %v15 = vld [vmem:[%s0] sm:$0xf]
  %v16 = vld [vmem:[%s0 + $0x4] sm:$0xf]
  %v17 = vld [vmem:[%s0 + $0x8] sm:$0xf]
  %v18 = vld [vmem:[%s0 + $0xc] sm:$0xf]
  %v19 = vld [vmem:[%s0 + $0x10] sm:$0xf]
  %v20 = vld [vmem:[%s0 + $0x14] sm:$0xf]
  %v21 = vld [vmem:[%s0 + $0x18] sm:$0xf]
  %v22 = vld [vmem:[%s0 + $0x1c] sm:$0xf]
  %v23 = vld [vmem:[%s0 + $0x20] sm:$0xf]
  %v24 = vld [vmem:[%s0 + $0x24] sm:$0xf]
  %v25 = vld [vmem:[%s0 + $0x28] sm:$0xf]
  %v26 = vld [vmem:[%s0 + $0x2c] sm:$0xf]
  %v27 = vld [vmem:[%s0 + $0x30] sm:$0xf]
  %v28 = vld [vmem:[%s0 + $0x34] sm:$0xf]
  %v29 = vld [vmem:[%s0 + $0x38] sm:$0xf]
  %v30 = vld [vmem:[%s0 + $0x3c] sm:$0xf]
  %v31 = vld [vmem:[%s0 + $0x40] sm:$0xf]
  %v32 = vld [vmem:[%s0 + $0x44] sm:$0xf]
  %v33 = vld [vmem:[%s0 + $0x48] sm:$0xf]
  %v34 = vld [vmem:[%s0 + $0x4c] sm:$0xf]
  %v35 = vld [vmem:[%s0 + $0x50] sm:$0xf]
  %v36 = vld [vmem:[%s0 + $0x54] sm:$0xf]
  %v37 = vld [vmem:[%s0 + $0x58] sm:$0xf]
  %v38 = vld [vmem:[%s0 + $0x5c] sm:$0xf]
  %v39 = vld [vmem:[%s0 + $0x60] sm:$0xf]
  %v40 = vld [vmem:[%s0 + $0x64] sm:$0xf]
  %v41 = vld [vmem:[%s1] sm:$0xf]
  %v42 = vld [vmem:[%s1 + $0x4] sm:$0xf]
  %v43 = vld [vmem:[%s1 + $0x8] sm:$0x1]
  %v70 = vunpack.c.l.b16 %v15
  %v71 = vunpack.c.l.b16 %v16
  %v72 = vunpack.c.l.b16 %v17
  %v73 = vunpack.c.l.b16 %v18
  %v74 = vunpack.c.l.b16 %v19
  %v75 = vunpack.c.l.b16 %v20
  %v76 = vunpack.c.l.b16 %v21
  %v77 = vunpack.c.l.b16 %v22
  %v78 = vunpack.c.l.b16 %v23
  %v79 = vunpack.c.l.b16 %v24
  %v80 = vunpack.c.l.b16 %v25
  %v81 = vunpack.c.l.b16 %v26
  %v82 = vunpack.c.l.b16 %v27
  %v83 = vunpack.c.l.b16 %v28
  %v84 = vunpack.c.l.b16 %v29
  %v85 = vunpack.c.l.b16 %v30
  %v86 = vunpack.c.l.b16 %v31
  %v87 = vunpack.c.l.b16 %v32
  %v88 = vunpack.c.l.b16 %v33
  %v89 = vunpack.c.l.b16 %v34
  %v90 = vunpack.c.l.b16 %v35
  %v91 = vunpack.c.l.b16 %v36
  %v92 = vunpack.c.l.b16 %v37
  %v93 = vunpack.c.l.b16 %v38
  %v94 = vunpack.c.l.b16 %v39
  %v95 = vunpack.c.l.b16 %v40
  %v96 = vpack.c.b16 %v71, %v70
  %v97 = vpack.c.b16 %v73, %v72
  %v98 = vpack.c.b16 %v75, %v74
  %v99 = vpack.c.b16 %v77, %v76
  %v100 = vpack.c.b16 %v79, %v78
  %v101 = vpack.c.b16 %v81, %v80
  %v102 = vpack.c.b16 %v83, %v82
  %v103 = vpack.c.b16 %v85, %v84
  %v104 = vpack.c.b16 %v87, %v86
  %v105 = vpack.c.b16 %v89, %v88
  %v106 = vpack.c.b16 %v91, %v90
  %v107 = vpack.c.b16 %v93, %v92
  %v108 = vpack.c.b16 %v95, %v94
  %v112 = vunpack.c.l.b16 %v41
  %v113 = vunpack.c.l.b16 %v42
  %v114 = vunpack.c.l.b16 %v43
  %v115 = vpack.c.b16 %v113, %v112
  %v116 = vpack.c.b16 %v114, %v114
  %vm118 = vcmask 138240
  %v120 = vsel %vm118, %v96, 0
  %v123 = vsel %vm118, %v97, 0
  %v126 = vsel %vm118, %v98, 0
  %v129 = vsel %vm118, %v99, 0
  %v132 = vsel %vm118, %v100, 0
  %v135 = vsel %vm118, %v101, 0
  %v138 = vsel %vm118, %v102, 0
  %v141 = vsel %vm118, %v103, 0
  %v144 = vsel %vm118, %v104, 0
  %v147 = vsel %vm118, %v105, 0
  %v150 = vsel %vm118, %v106, 0
  %v153 = vsel %vm118, %v107, 0
  %v156 = vsel %vm118, %v108, 0
  %vm158 = vcmask 1040384
  %v159 = vsel 0, 4294967295, 65535
  %v160 = vsel %vm158, %v159, 0
  %v162 = vand.u32 %v116, %v160
  %164 = vmatprep.subr.bf16.mxu0 0
  %165 = vmatpush1.bf16.msra.mxu0 %v115
  %166 = vmatprep.subr.bf16.mxu0 0
  %167 = vmatpush1.bf16.msra.mxu0 %v162
  %168 = vmatprep.subr.bf16.mxu0 0
  %169 = vmatpush1.bf16.msra.mxu0 0
  %170 = vmatprep.subr.bf16.mxu0 0
  %171 = vmatpush1.bf16.msra.mxu0 0
  %172 = vmatprep.subr.bf16.mxu0 0
  %173 = vmatpush1.bf16.msra.mxu0 0
  %174 = vmatprep.subr.bf16.mxu0 0
  %175 = vmatpush1.bf16.msra.mxu0 0
  %176 = vmatprep.subr.bf16.mxu0 0
  %177 = vmatpush1.bf16.msra.mxu0 0
  %178 = vmatprep.subr.bf16.mxu0 0
  %179 = vmatpush1.bf16.msra.mxu0 0
  %180 = vmatprep.subr.bf16.mxu0 0
  %181 = vmatpush1.bf16.msra.mxu0 0
  %182 = vmatprep.subr.bf16.mxu0 0
  %183 = vmatpush1.bf16.msra.mxu0 0
  %184 = vmatprep.subr.bf16.mxu0 0
  %185 = vmatpush1.bf16.msra.mxu0 0
  %186 = vmatprep.subr.bf16.mxu0 0
  %187 = vmatpush1.bf16.msra.mxu0 0
  %188 = vmatprep.subr.bf16.mxu0 0
  %189 = vmatpush1.bf16.msra.mxu0 0
  %190 = vmatprep.subr.bf16.mxu0 0
  %191 = vmatpush1.bf16.msra.mxu0 0
  %192 = vmatprep.subr.bf16.mxu0 0
  %193 = vmatpush1.bf16.msra.mxu0 0
  %194 = vmatprep.subr.bf16.mxu0 0
  %195 = vmatpush1.bf16.msra.mxu0 0
  %196 = vmatprep.mubr.bf16.mxu0 0
  %197 = vmatmul.mubr.bf16.gmra.mrb[0].mxu0 %v120
  %v198 = vpop.f32.mrb[0].mxu0
  %v199 = vadd.f32 0.0, %v198
  %v200 = vpop.f32.mrb[0].mxu0
  %v201 = vpop.f32.mrb[0].mxu0
  %v202 = vadd.f32 0.0, %v201
  %v203 = vpop.f32.mrb[0].mxu0
  %204 = vmatprep.mubr.bf16.mxu0 0
  %205 = vmatmul.mubr.bf16.gmra.mrb[0].mxu0 %v123
  %v206 = vpop.f32.mrb[0].mxu0
  %v207 = vadd.f32 0.0, %v206
  %v208 = vpop.f32.mrb[0].mxu0
  %v209 = vpop.f32.mrb[0].mxu0
  %v210 = vadd.f32 0.0, %v209
  %v211 = vpop.f32.mrb[0].mxu0
  %212 = vmatprep.mubr.bf16.mxu0 0
  %213 = vmatmul.mubr.bf16.gmra.mrb[0].mxu0 %v126
  %v214 = vpop.f32.mrb[0].mxu0
  %v215 = vadd.f32 0.0, %v214
  %v216 = vpop.f32.mrb[0].mxu0
  %v217 = vpop.f32.mrb[0].mxu0
  %v218 = vadd.f32 0.0, %v217
  %v219 = vpop.f32.mrb[0].mxu0
  %220 = vmatprep.mubr.bf16.mxu0 0
  %221 = vmatmul.mubr.bf16.gmra.mrb[0].mxu0 %v129
  %v222 = vpop.f32.mrb[0].mxu0
  %v223 = vadd.f32 0.0, %v222
  %v224 = vpop.f32.mrb[0].mxu0
  %v225 = vpop.f32.mrb[0].mxu0
  %v226 = vadd.f32 0.0, %v225
  %v227 = vpop.f32.mrb[0].mxu0
  %228 = vmatprep.mubr.bf16.mxu0 0
  %229 = vmatmul.mubr.bf16.gmra.mrb[0].mxu0 %v132
  %v230 = vpop.f32.mrb[0].mxu0
  %v231 = vadd.f32 0.0, %v230
  %v232 = vpop.f32.mrb[0].mxu0
  %v233 = vpop.f32.mrb[0].mxu0
  %v234 = vadd.f32 0.0, %v233
  %v235 = vpop.f32.mrb[0].mxu0
  %236 = vmatprep.mubr.bf16.mxu0 0
  %237 = vmatmul.mubr.bf16.gmra.mrb[0].mxu0 %v135
  %v238 = vpop.f32.mrb[0].mxu0
  %v239 = vadd.f32 0.0, %v238
  %v240 = vpop.f32.mrb[0].mxu0
  %v241 = vpop.f32.mrb[0].mxu0
  %v242 = vadd.f32 0.0, %v241
  %v243 = vpop.f32.mrb[0].mxu0
  %244 = vmatprep.mubr.bf16.mxu0 0
  %245 = vmatmul.mubr.bf16.gmra.mrb[0].mxu0 %v138
  %v246 = vpop.f32.mrb[0].mxu0
  %v247 = vadd.f32 0.0, %v246
  %v248 = vpop.f32.mrb[0].mxu0
  %v249 = vpop.f32.mrb[0].mxu0
  %v250 = vadd.f32 0.0, %v249
  %v251 = vpop.f32.mrb[0].mxu0
  %252 = vmatprep.mubr.bf16.mxu0 0
  %253 = vmatmul.mubr.bf16.gmra.mrb[0].mxu0 %v141
  %v254 = vpop.f32.mrb[0].mxu0
  %v255 = vadd.f32 0.0, %v254
  %v256 = vpop.f32.mrb[0].mxu0
  %v257 = vpop.f32.mrb[0].mxu0
  %v258 = vadd.f32 0.0, %v257
  %v259 = vpop.f32.mrb[0].mxu0
  %260 = vmatprep.mubr.bf16.mxu0 0
  %261 = vmatmul.mubr.bf16.gmra.mrb[0].mxu0 %v144
  %v262 = vpop.f32.mrb[0].mxu0
  %v263 = vadd.f32 0.0, %v262
  %v264 = vpop.f32.mrb[0].mxu0
  %v265 = vpop.f32.mrb[0].mxu0
  %v266 = vadd.f32 0.0, %v265
  %v267 = vpop.f32.mrb[0].mxu0
  %268 = vmatprep.mubr.bf16.mxu0 0
  %269 = vmatmul.mubr.bf16.gmra.mrb[0].mxu0 %v147
  %v270 = vpop.f32.mrb[0].mxu0
  %v271 = vadd.f32 0.0, %v270
  %v272 = vpop.f32.mrb[0].mxu0
  %v273 = vpop.f32.mrb[0].mxu0
  %v274 = vadd.f32 0.0, %v273
  %v275 = vpop.f32.mrb[0].mxu0
  %276 = vmatprep.mubr.bf16.mxu0 0
  %277 = vmatmul.mubr.bf16.gmra.mrb[0].mxu0 %v150
  %v278 = vpop.f32.mrb[0].mxu0
  %v279 = vadd.f32 0.0, %v278
  %v280 = vpop.f32.mrb[0].mxu0
  %v281 = vpop.f32.mrb[0].mxu0
  %v282 = vadd.f32 0.0, %v281
  %v283 = vpop.f32.mrb[0].mxu0
  %284 = vmatprep.mubr.bf16.mxu0 0
  %285 = vmatmul.mubr.bf16.gmra.mrb[0].mxu0 %v153
  %v286 = vpop.f32.mrb[0].mxu0
  %v287 = vadd.f32 0.0, %v286
  %v288 = vpop.f32.mrb[0].mxu0
  %v289 = vpop.f32.mrb[0].mxu0
  %v290 = vadd.f32 0.0, %v289
  %v291 = vpop.f32.mrb[0].mxu0
  %292 = vmatprep.mubr.bf16.mxu0 0
  %293 = vmatmul.mubr.bf16.gmra.mrb[0].mxu0 %v156
  %v294 = vpop.f32.mrb[0].mxu0
  %v295 = vadd.f32 0.0, %v294
  %v296 = vpop.f32.mrb[0].mxu0
  %v297 = vpop.f32.mrb[0].mxu0
  %v298 = vadd.f32 0.0, %v297
  %v299 = vpop.f32.mrb[0].mxu0
  %300 = vdwg.mxu0
  %v301 = vmax.f32 %v199, 0.0
  %v302 = vmax.f32 %v202, 0.0
  %v303 = vmax.f32 %v207, 0.0
  %v304 = vmax.f32 %v210, 0.0
  %v305 = vmax.f32 %v215, 0.0
  %v306 = vmax.f32 %v218, 0.0
  %v307 = vmax.f32 %v223, 0.0
  %v308 = vmax.f32 %v226, 0.0
  %v309 = vmax.f32 %v231, 0.0
  %v310 = vmax.f32 %v234, 0.0
  %v311 = vmax.f32 %v239, 0.0
  %v312 = vmax.f32 %v242, 0.0
  %v313 = vmax.f32 %v247, 0.0
  %v314 = vmax.f32 %v250, 0.0
  %v315 = vmax.f32 %v255, 0.0
  %v316 = vmax.f32 %v258, 0.0
  %v317 = vmax.f32 %v263, 0.0
  %v318 = vmax.f32 %v266, 0.0
  %v319 = vmax.f32 %v271, 0.0
  %v320 = vmax.f32 %v274, 0.0
  %v321 = vmax.f32 %v279, 0.0
  %v322 = vmax.f32 %v282, 0.0
  %v323 = vmax.f32 %v287, 0.0
  %v324 = vmax.f32 %v290, 0.0
  %v325 = vmax.f32 %v295, 0.0
  %v326 = vmax.f32 %v298, 0.0
  %v327 = vld [vmem:[%s2] sm:$0x1]
  %v329 = vlaneseq
  %v330 = vshrl.u32 %v329, 7
  %v331 = vsub.s32 0, %v330
  %v332 = vrot.slane %v327, %v331
  %v334 = vmul.f32 %v301, %v332
  %v335 = vmul.f32 %v302, %v332
  %v336 = vmul.f32 %v303, %v332
  %v337 = vmul.f32 %v304, %v332
  %v338 = vmul.f32 %v305, %v332
  %v339 = vmul.f32 %v306, %v332
  %v340 = vmul.f32 %v307, %v332
  %v341 = vmul.f32 %v308, %v332
  %v342 = vmul.f32 %v309, %v332
  %v343 = vmul.f32 %v310, %v332
  %v344 = vmul.f32 %v311, %v332
  %v345 = vmul.f32 %v312, %v332
  %v346 = vmul.f32 %v313, %v332
  %v347 = vmul.f32 %v314, %v332
  %v348 = vmul.f32 %v315, %v332
  %v349 = vmul.f32 %v316, %v332
  %v350 = vmul.f32 %v317, %v332
  %v351 = vmul.f32 %v318, %v332
  %v352 = vmul.f32 %v319, %v332
  %v353 = vmul.f32 %v320, %v332
  %v354 = vmul.f32 %v321, %v332
  %v355 = vmul.f32 %v322, %v332
  %v356 = vmul.f32 %v323, %v332
  %v357 = vmul.f32 %v324, %v332
  %v358 = vmul.f32 %v325, %v332
  %v359 = vmul.f32 %v326, %v332
  %360 = vadd.xlane.f32.xlu0 %v334
  %v361 = vpop.xlane.xlu0 %360
  %362 = vadd.xlane.f32.xlu0 %v335
  %v363 = vpop.xlane.xlu0 %362
  %364 = vadd.xlane.f32.xlu0 %v336
  %v365 = vpop.xlane.xlu0 %364
  %366 = vadd.xlane.f32.xlu0 %v337
  %v367 = vpop.xlane.xlu0 %366
  %368 = vadd.xlane.f32.xlu0 %v338
  %v369 = vpop.xlane.xlu0 %368
  %370 = vadd.xlane.f32.xlu0 %v339
  %v371 = vpop.xlane.xlu0 %370
  %372 = vadd.xlane.f32.xlu0 %v340
  %v373 = vpop.xlane.xlu0 %372
  %374 = vadd.xlane.f32.xlu0 %v341
  %v375 = vpop.xlane.xlu0 %374
  %376 = vadd.xlane.f32.xlu0 %v342
  %v377 = vpop.xlane.xlu0 %376
  %378 = vadd.xlane.f32.xlu0 %v343
  %v379 = vpop.xlane.xlu0 %378
  %380 = vadd.xlane.f32.xlu0 %v344
  %v381 = vpop.xlane.xlu0 %380
  %382 = vadd.xlane.f32.xlu0 %v345
  %v383 = vpop.xlane.xlu0 %382
  %384 = vadd.xlane.f32.xlu0 %v346
  %v385 = vpop.xlane.xlu0 %384
  %386 = vadd.xlane.f32.xlu0 %v347
  %v387 = vpop.xlane.xlu0 %386
  %388 = vadd.xlane.f32.xlu0 %v348
  %v389 = vpop.xlane.xlu0 %388
  %390 = vadd.xlane.f32.xlu0 %v349
  %v391 = vpop.xlane.xlu0 %390
  %392 = vadd.xlane.f32.xlu0 %v350
  %v393 = vpop.xlane.xlu0 %392
  %394 = vadd.xlane.f32.xlu0 %v351
  %v395 = vpop.xlane.xlu0 %394
  %396 = vadd.xlane.f32.xlu0 %v352
  %v397 = vpop.xlane.xlu0 %396
  %398 = vadd.xlane.f32.xlu0 %v353
  %v399 = vpop.xlane.xlu0 %398
  %400 = vadd.xlane.f32.xlu0 %v354
  %v401 = vpop.xlane.xlu0 %400
  %402 = vadd.xlane.f32.xlu0 %v355
  %v403 = vpop.xlane.xlu0 %402
  %404 = vadd.xlane.f32.xlu0 %v356
  %v405 = vpop.xlane.xlu0 %404
  %406 = vadd.xlane.f32.xlu0 %v357
  %v407 = vpop.xlane.xlu0 %406
  %408 = vadd.xlane.f32.xlu0 %v358
  %v409 = vpop.xlane.xlu0 %408
  %410 = vadd.xlane.f32.xlu0 %v359
  %v411 = vpop.xlane.xlu0 %410
  %v412 = vsub.f32 0.0, %v361
  %v413 = vsub.f32 0.0, %v363
  %v414 = vsub.f32 0.0, %v365
  %v415 = vsub.f32 0.0, %v367
  %v416 = vsub.f32 0.0, %v369
  %v417 = vsub.f32 0.0, %v371
  %v418 = vsub.f32 0.0, %v373
  %v419 = vsub.f32 0.0, %v375
  %v420 = vsub.f32 0.0, %v377
  %v421 = vsub.f32 0.0, %v379
  %v422 = vsub.f32 0.0, %v381
  %v423 = vsub.f32 0.0, %v383
  %v424 = vsub.f32 0.0, %v385
  %v425 = vsub.f32 0.0, %v387
  %v426 = vsub.f32 0.0, %v389
  %v427 = vsub.f32 0.0, %v391
  %v428 = vsub.f32 0.0, %v393
  %v429 = vsub.f32 0.0, %v395
  %v430 = vsub.f32 0.0, %v397
  %v431 = vsub.f32 0.0, %v399
  %v432 = vsub.f32 0.0, %v401
  %v433 = vsub.f32 0.0, %v403
  %v434 = vsub.f32 0.0, %v405
  %v435 = vsub.f32 0.0, %v407
  %v436 = vsub.f32 0.0, %v409
  %v437 = vsub.f32 0.0, %v411
  %v438 = vmul.f32 %v412, 1.442695
  %v439 = vpow.pop %v438
  %v440 = vmul.f32 %v413, 1.442695
  %v441 = vpow.pop %v440
  %v442 = vmul.f32 %v414, 1.442695
  %v443 = vpow.pop %v442
  %v444 = vmul.f32 %v415, 1.442695
  %v445 = vpow.pop %v444
  %v446 = vmul.f32 %v416, 1.442695
  %v447 = vpow.pop %v446
  %v448 = vmul.f32 %v417, 1.442695
  %v449 = vpow.pop %v448
  %v450 = vmul.f32 %v418, 1.442695
  %v451 = vpow.pop %v450
  %v452 = vmul.f32 %v419, 1.442695
  %v453 = vpow.pop %v452
  %v454 = vmul.f32 %v420, 1.442695
  %v455 = vpow.pop %v454
  %v456 = vmul.f32 %v421, 1.442695
  %v457 = vpow.pop %v456
  %v458 = vmul.f32 %v422, 1.442695
  %v459 = vpow.pop %v458
  %v460 = vmul.f32 %v423, 1.442695
  %v461 = vpow.pop %v460
  %v462 = vmul.f32 %v424, 1.442695
  %v463 = vpow.pop %v462
  %v464 = vmul.f32 %v425, 1.442695
  %v465 = vpow.pop %v464
  %v466 = vmul.f32 %v426, 1.442695
  %v467 = vpow.pop %v466
  %v468 = vmul.f32 %v427, 1.442695
  %v469 = vpow.pop %v468
  %v470 = vmul.f32 %v428, 1.442695
  %v471 = vpow.pop %v470
  %v472 = vmul.f32 %v429, 1.442695
  %v473 = vpow.pop %v472
  %v474 = vmul.f32 %v430, 1.442695
  %v475 = vpow.pop %v474
  %v476 = vmul.f32 %v431, 1.442695
  %v477 = vpow.pop %v476
  %v478 = vmul.f32 %v432, 1.442695
  %v479 = vpow.pop %v478
  %v480 = vmul.f32 %v433, 1.442695
  %v481 = vpow.pop %v480
  %v482 = vmul.f32 %v434, 1.442695
  %v483 = vpow.pop %v482
  %v484 = vmul.f32 %v435, 1.442695
  %v485 = vpow.pop %v484
  %v486 = vmul.f32 %v436, 1.442695
  %v487 = vpow.pop %v486
  %v488 = vmul.f32 %v437, 1.442695
  %v489 = vpow.pop %v488
  %v490 = vadd.f32 %v439, 1.0
  %v491 = vadd.f32 %v441, 1.0
  %v492 = vadd.f32 %v443, 1.0
  %v493 = vadd.f32 %v445, 1.0
  %v494 = vadd.f32 %v447, 1.0
  %v495 = vadd.f32 %v449, 1.0
  %v496 = vadd.f32 %v451, 1.0
  %v497 = vadd.f32 %v453, 1.0
  %v498 = vadd.f32 %v455, 1.0
  %v499 = vadd.f32 %v457, 1.0
  %v500 = vadd.f32 %v459, 1.0
  %v501 = vadd.f32 %v461, 1.0
  %v502 = vadd.f32 %v463, 1.0
  %v503 = vadd.f32 %v465, 1.0
  %v504 = vadd.f32 %v467, 1.0
  %v505 = vadd.f32 %v469, 1.0
  %v506 = vadd.f32 %v471, 1.0
  %v507 = vadd.f32 %v473, 1.0
  %v508 = vadd.f32 %v475, 1.0
  %v509 = vadd.f32 %v477, 1.0
  %v510 = vadd.f32 %v479, 1.0
  %v511 = vadd.f32 %v481, 1.0
  %v512 = vadd.f32 %v483, 1.0
  %v513 = vadd.f32 %v485, 1.0
  %v514 = vadd.f32 %v487, 1.0
  %v515 = vadd.f32 %v489, 1.0
  %v516 = vrcp.pop %v490
  %v517 = vmul.f32 1.0, %v516
  %v518 = vrcp.pop %v491
  %v519 = vmul.f32 1.0, %v518
  %v520 = vrcp.pop %v492
  %v521 = vmul.f32 1.0, %v520
  %v522 = vrcp.pop %v493
  %v523 = vmul.f32 1.0, %v522
  %v524 = vrcp.pop %v494
  %v525 = vmul.f32 1.0, %v524
  %v526 = vrcp.pop %v495
  %v527 = vmul.f32 1.0, %v526
  %v528 = vrcp.pop %v496
  %v529 = vmul.f32 1.0, %v528
  %v530 = vrcp.pop %v497
  %v531 = vmul.f32 1.0, %v530
  %v532 = vrcp.pop %v498
  %v533 = vmul.f32 1.0, %v532
  %v534 = vrcp.pop %v499
  %v535 = vmul.f32 1.0, %v534
  %v536 = vrcp.pop %v500
  %v537 = vmul.f32 1.0, %v536
  %v538 = vrcp.pop %v501
  %v539 = vmul.f32 1.0, %v538
  %v540 = vrcp.pop %v502
  %v541 = vmul.f32 1.0, %v540
  %v542 = vrcp.pop %v503
  %v543 = vmul.f32 1.0, %v542
  %v544 = vrcp.pop %v504
  %v545 = vmul.f32 1.0, %v544
  %v546 = vrcp.pop %v505
  %v547 = vmul.f32 1.0, %v546
  %v548 = vrcp.pop %v506
  %v549 = vmul.f32 1.0, %v548
  %v550 = vrcp.pop %v507
  %v551 = vmul.f32 1.0, %v550
  %v552 = vrcp.pop %v508
  %v553 = vmul.f32 1.0, %v552
  %v554 = vrcp.pop %v509
  %v555 = vmul.f32 1.0, %v554
  %v556 = vrcp.pop %v510
  %v557 = vmul.f32 1.0, %v556
  %v558 = vrcp.pop %v511
  %v559 = vmul.f32 1.0, %v558
  %v560 = vrcp.pop %v512
  %v561 = vmul.f32 1.0, %v560
  %v562 = vrcp.pop %v513
  %v563 = vmul.f32 1.0, %v562
  %v564 = vrcp.pop %v514
  %v565 = vmul.f32 1.0, %v564
  %v566 = vrcp.pop %v515
  %v567 = vmul.f32 1.0, %v566
  %vm568 = vcmask 7168
  %569 = vst.msk [vmem:[%s3] sm:$0xff] %vm568, %v517
  %570 = vst.msk [vmem:[%s3 + $0x8] sm:$0xff] %vm568, %v519
  %571 = vst.msk [vmem:[%s3 + $0x10] sm:$0xff] %vm568, %v521
  %572 = vst.msk [vmem:[%s3 + $0x18] sm:$0xff] %vm568, %v523
  %573 = vst.msk [vmem:[%s3 + $0x20] sm:$0xff] %vm568, %v525
  %574 = vst.msk [vmem:[%s3 + $0x28] sm:$0xff] %vm568, %v527
  %575 = vst.msk [vmem:[%s3 + $0x30] sm:$0xff] %vm568, %v529
  %576 = vst.msk [vmem:[%s3 + $0x38] sm:$0xff] %vm568, %v531
  %577 = vst.msk [vmem:[%s3 + $0x40] sm:$0xff] %vm568, %v533
  %578 = vst.msk [vmem:[%s3 + $0x48] sm:$0xff] %vm568, %v535
  %579 = vst.msk [vmem:[%s3 + $0x50] sm:$0xff] %vm568, %v537
  %580 = vst.msk [vmem:[%s3 + $0x58] sm:$0xff] %vm568, %v539
  %581 = vst.msk [vmem:[%s3 + $0x60] sm:$0xff] %vm568, %v541
  %582 = vst.msk [vmem:[%s3 + $0x68] sm:$0xff] %vm568, %v543
  %583 = vst.msk [vmem:[%s3 + $0x70] sm:$0xff] %vm568, %v545
  %584 = vst.msk [vmem:[%s3 + $0x78] sm:$0xff] %vm568, %v547
  %585 = vst.msk [vmem:[%s3 + $0x80] sm:$0xff] %vm568, %v549
  %586 = vst.msk [vmem:[%s3 + $0x88] sm:$0xff] %vm568, %v551
  %587 = vst.msk [vmem:[%s3 + $0x90] sm:$0xff] %vm568, %v553
  %588 = vst.msk [vmem:[%s3 + $0x98] sm:$0xff] %vm568, %v555
  %589 = vst.msk [vmem:[%s3 + $0xa0] sm:$0xff] %vm568, %v557
  %590 = vst.msk [vmem:[%s3 + $0xa8] sm:$0xff] %vm568, %v559
  %591 = vst.msk [vmem:[%s3 + $0xb0] sm:$0xff] %vm568, %v561
  %592 = vst.msk [vmem:[%s3 + $0xb8] sm:$0xff] %vm568, %v563
  %593 = vst.msk [vmem:[%s3 + $0xc0] sm:$0xff] %vm568, %v565
  %594 = vst.msk [vmem:[%s3 + $0xc8] sm:$0xff] %vm568, %v567
  // Predicated region
  $region14: #{tpu_custom_call.1} parent=0 // pred_check
    _
  $region15: #{tpu_custom_call.1} parent=0 // pred_check_branch
    %596 = sbr.rel (0) target = $region17
  $region16: #{tpu_custom_call.1} parent=0 // pred_region
    _
  $region17: #{tpu_custom_call.1} parent=0 // pred_fallthru
    _
  // Predicated region
  $region18: #{tpu_custom_call.1} parent=0 // pred_check
    _
  $region19: #{tpu_custom_call.1} parent=0 // pred_check_branch
    %598 = sbr.rel (0) target = $region21
  $region20: #{tpu_custom_call.1} parent=0 // pred_region
    _
  $region21: #{tpu_custom_call.1} parent=0 // pred_fallthru
    _

</llo_original>
